<compile_context>
chip_gen: v7x
topology: tpu7x:2x2x1
jax: 0.10.0
libtpu: 0.0.40
codegen_flags: <defaults>
</compile_context>

<pallas_src>
import jax
import jax.numpy as jnp
from jax.experimental import pallas as pl
from jax.experimental.pallas import tpu as pltpu

_LANE = 128      # vreg lane width (fast axis)
_SUBLANE = 8     # f32 sublane granularity


def _round_up(x, m):
    return ((x + m - 1) // m) * m


def seq2seq_kernel(x_ref, wenc_ref, benc_ref, wdec_ref, bdec_ref, out_ref):
    # encoder Linear: (TR, D_in) @ (D_in, H) + (1, H)   -- f32 accumulation
    h = jnp.dot(x_ref[...], wenc_ref[...],
                preferred_element_type=jnp.float32) + benc_ref[...]
    # (B, S, H) -> (B*S, H) reshape is the identity on these row tiles.
    h = h.astype(wdec_ref.dtype)
    # decoder Linear: (TR, H) @ (H, D_out) + (1, D_out) -- f32 accumulation
    y = jnp.dot(h, wdec_ref[...],
                preferred_element_type=jnp.float32) + bdec_ref[...]
    out_ref[...] = y.astype(out_ref.dtype)


def seq2seq_forward(sequence, w_enc, b_enc, w_dec, b_dec, *, row_tile=256):
    """sequence: (B, S, D_in); returns prediction: (B*S, D_out)."""
    B, S, D_in = sequence.shape
    H = w_enc.shape[1]
    D_out = w_dec.shape[1]
    N = B * S
    dtype = sequence.dtype
    itemsize = jnp.dtype(dtype).itemsize

    # Lane-dense (128-multiple) feature dims; sublane-aligned row tile,
    # clamped so a tiny problem does not get a huge all-padding tile.
    D_in_p = _round_up(D_in, _LANE)
    H_p = _round_up(H, _LANE)
    D_out_p = _round_up(D_out, _LANE)
    tr = min(_round_up(row_tile, _SUBLANE), _round_up(N, _SUBLANE))
    N_p = _round_up(N, tr)

    # Zero padding is exact: zero rows/cols contribute nothing to the dots,
    # and the padded output rows/cols are sliced off below.
    x = sequence.reshape(N, D_in)
    x_p = jnp.pad(x, ((0, N_p - N), (0, D_in_p - D_in)))
    w_enc_p = jnp.pad(w_enc, ((0, D_in_p - D_in), (0, H_p - H)))
    b_enc_p = jnp.pad(b_enc.reshape(1, H), ((0, 0), (0, H_p - H)))
    w_dec_p = jnp.pad(w_dec, ((0, H_p - H), (0, D_out_p - D_out)))
    b_dec_p = jnp.pad(b_dec.reshape(1, D_out), ((0, 0), (0, D_out_p - D_out)))

    grid = (N_p // tr,)

    # Advisory cost estimate for XLA's scheduler.
    flops = 2 * N_p * (D_in_p * H_p + H_p * D_out_p)
    bytes_accessed = itemsize * (
        x_p.size + w_enc_p.size + b_enc_p.size + w_dec_p.size + b_dec_p.size
        + N_p * D_out_p)
    cost = pl.CostEstimate(flops=flops, transcendentals=0,
                           bytes_accessed=bytes_accessed)

    # VMEM budget: each BlockSpec input/output is double-buffered, plus the
    # f32 intermediate h tile.  Clamp below v7x's 64 MiB per-TensorCore.
    vmem_needed = 2 * itemsize * (
        tr * D_in_p + D_in_p * H_p + H_p + H_p * D_out_p + D_out_p
        + tr * D_out_p) + 4 * tr * H_p
    vmem_limit = int(min(max(2 * vmem_needed, 8 << 20), 48 << 20))

    # TODO(synk): for D_in/H too large for the full weights to stay VMEM-resident,
    # add a K reduction grid axis ("arbitrary") with a f32 VMEM accumulator and
    # pl.when init/finalize instead of loading full-width W_enc/W_dec per step.
    out_p = pl.pallas_call(
        seq2seq_kernel,
        out_shape=jax.ShapeDtypeStruct((N_p, D_out_p), dtype),
        grid_spec=pltpu.PrefetchScalarGridSpec(
            num_scalar_prefetch=0,
            grid=grid,
            in_specs=[
                pl.BlockSpec((tr, D_in_p), lambda i: (i, 0)),    # x row tile
                pl.BlockSpec((D_in_p, H_p), lambda i: (0, 0)),   # W_enc
                pl.BlockSpec((1, H_p), lambda i: (0, 0)),        # b_enc
                pl.BlockSpec((H_p, D_out_p), lambda i: (0, 0)),  # W_dec
                pl.BlockSpec((1, D_out_p), lambda i: (0, 0)),    # b_dec
            ],
            out_specs=pl.BlockSpec((tr, D_out_p), lambda i: (i, 0)),
        ),
        compiler_params=pltpu.CompilerParams(
            dimension_semantics=("parallel",),
            vmem_limit_bytes=vmem_limit),
        cost_estimate=cost,
    )(x_p, w_enc_p, b_enc_p, w_dec_p, b_dec_p)

    # Drop the row/lane padding.
    return out_p[:N, :D_out]


def seq2seq_reference(sequence, w_enc, b_enc, w_dec, b_dec):
    enc = jnp.einsum("bsd,dh->bsh", sequence, w_enc) + b_enc
    enc = enc.reshape(-1, enc.shape[2])
    return enc @ w_dec + b_dec


if __name__ == "__main__":
    # Small shapes consistent with the forward pass.
    B, S, D_in, H, D_out = 2, 8, 16, 32, 16

    key = jax.random.PRNGKey(0)
    k_x, k_we, k_be, k_wd, k_bd = jax.random.split(key, 5)

    # Deterministic parameter init (PyTorch-Linear-like uniform bounds).
    lim_e = 1.0 / jnp.sqrt(D_in)
    lim_d = 1.0 / jnp.sqrt(H)
    sequence = jax.random.normal(k_x, (B, S, D_in), dtype=jnp.float32)
    w_enc = jax.random.uniform(k_we, (D_in, H), jnp.float32, -lim_e, lim_e)
    b_enc = jax.random.uniform(k_be, (H,), jnp.float32, -lim_e, lim_e)
    w_dec = jax.random.uniform(k_wd, (H, D_out), jnp.float32, -lim_d, lim_d)
    b_dec = jax.random.uniform(k_bd, (D_out,), jnp.float32, -lim_d, lim_d)

    out = seq2seq_forward(sequence, w_enc, b_enc, w_dec, b_dec)
    out = jax.block_until_ready(out)

    ref = seq2seq_reference(sequence, w_enc, b_enc, w_dec, b_dec)
    assert out.shape == (B * S, D_out)
    assert jnp.allclose(out, ref, atol=1e-5, rtol=1e-5)

    print("KERNEL_OK")
</pallas_src>

<mosaic_0001>
module attributes {stable_mosaic.version = 11 : i64} {
  func.func @seq2seq_kernel(%arg0: i32, %arg1: memref<16x128xf32, #tpu.memory_space<vmem>>, %arg2: memref<128x128xf32, #tpu.memory_space<vmem>>, %arg3: memref<1x128xf32, #tpu.memory_space<vmem>>, %arg4: memref<128x128xf32, #tpu.memory_space<vmem>>, %arg5: memref<1x128xf32, #tpu.memory_space<vmem>>, %arg6: memref<16x128xf32, #tpu.memory_space<vmem>>) attributes {dimension_semantics = [#tpu.dimension_semantics<parallel>], iteration_bounds = array<i64: 1>, scalar_prefetch = 0 : i64, scratch_operands = 0 : i64, tpu.core_type = #tpu.core_type<tc>, window_params = [{transform_indices = @transform_0, window_bounds = array<i64: 16, 128>}, {pipeline_mode = #tpu.pipeline_mode<synchronous>, transform_indices = @transform_1, window_bounds = array<i64: 128, 128>}, {pipeline_mode = #tpu.pipeline_mode<synchronous>, transform_indices = @transform_2, window_bounds = array<i64: 1, 128>}, {pipeline_mode = #tpu.pipeline_mode<synchronous>, transform_indices = @transform_3, window_bounds = array<i64: 128, 128>}, {pipeline_mode = #tpu.pipeline_mode<synchronous>, transform_indices = @transform_4, window_bounds = array<i64: 1, 128>}, {transform_indices = @transform_5, window_bounds = array<i64: 16, 128>}]} {
    %c0 = arith.constant 0 : index
    %c0_0 = arith.constant 0 : index
    %0 = vector.load %arg1[%c0, %c0_0] : memref<16x128xf32, #tpu.memory_space<vmem>>, vector<16x128xf32>
    %c0_1 = arith.constant 0 : index
    %c0_2 = arith.constant 0 : index
    %1 = vector.load %arg2[%c0_1, %c0_2] : memref<128x128xf32, #tpu.memory_space<vmem>>, vector<128x128xf32>
    %cst = arith.constant dense<0.000000e+00> : vector<16x128xf32>
    %2 = tpu.matmul %0, %1, %cst {dimension_numbers = #tpu.dot_dimension_numbers<[1], [0], [0], [1], [0, 0, 1, 1], [], []>} : vector<16x128xf32>, vector<128x128xf32>, vector<16x128xf32> -> vector<16x128xf32>
    %c0_3 = arith.constant 0 : index
    %c0_4 = arith.constant 0 : index
    %3 = vector.load %arg3[%c0_3, %c0_4] : memref<1x128xf32, #tpu.memory_space<vmem>>, vector<1x128xf32>
    %4 = vector.broadcast %3 : vector<1x128xf32> to vector<16x128xf32>
    %5 = arith.addf %2, %4 : vector<16x128xf32>
    %c0_5 = arith.constant 0 : index
    %c0_6 = arith.constant 0 : index
    %6 = vector.load %arg4[%c0_5, %c0_6] : memref<128x128xf32, #tpu.memory_space<vmem>>, vector<128x128xf32>
    %cst_7 = arith.constant dense<0.000000e+00> : vector<16x128xf32>
    %7 = tpu.matmul %5, %6, %cst_7 {dimension_numbers = #tpu.dot_dimension_numbers<[1], [0], [0], [1], [0, 0, 1, 1], [], []>} : vector<16x128xf32>, vector<128x128xf32>, vector<16x128xf32> -> vector<16x128xf32>
    %c0_8 = arith.constant 0 : index
    %c0_9 = arith.constant 0 : index
    %8 = vector.load %arg5[%c0_8, %c0_9] : memref<1x128xf32, #tpu.memory_space<vmem>>, vector<1x128xf32>
    %9 = vector.broadcast %8 : vector<1x128xf32> to vector<16x128xf32>
    %10 = arith.addf %7, %9 : vector<16x128xf32>
    %c0_10 = arith.constant 0 : index
    %c0_11 = arith.constant 0 : index
    %11 = vector.load %arg6[%c0_10, %c0_11] : memref<16x128xf32, #tpu.memory_space<vmem>>, vector<16x128xf32>
    tpu.vector_store %arg6[%c0_10, %c0_11], %10 {strides = array<i32>} : memref<16x128xf32, #tpu.memory_space<vmem>>, vector<16x128xf32>,
    return
  }
  func.func @transform_0(%arg0: i32) -> (i32, i32) {
    %c0_i32 = arith.constant 0 : i32
    %c0_i32_0 = arith.constant 0 : i32
    return %arg0, %c0_i32 : i32, i32
  }
  func.func @transform_1(%arg0: i32) -> (i32, i32) {
    %c0_i32 = arith.constant 0 : i32
    %c0_i32_0 = arith.constant 0 : i32
    %c0_i32_1 = arith.constant 0 : i32
    return %c0_i32, %c0_i32_0 : i32, i32
  }
  func.func @transform_2(%arg0: i32) -> (i32, i32) {
    %c0_i32 = arith.constant 0 : i32
    %c0_i32_0 = arith.constant 0 : i32
    %c0_i32_1 = arith.constant 0 : i32
    return %c0_i32, %c0_i32_0 : i32, i32
  }
  func.func @transform_3(%arg0: i32) -> (i32, i32) {
    %c0_i32 = arith.constant 0 : i32
    %c0_i32_0 = arith.constant 0 : i32
    %c0_i32_1 = arith.constant 0 : i32
    return %c0_i32, %c0_i32_0 : i32, i32
  }
  func.func @transform_4(%arg0: i32) -> (i32, i32) {
    %c0_i32 = arith.constant 0 : i32
    %c0_i32_0 = arith.constant 0 : i32
    %c0_i32_1 = arith.constant 0 : i32
    return %c0_i32, %c0_i32_0 : i32, i32
  }
  func.func @transform_5(%arg0: i32) -> (i32, i32) {
    %c0_i32 = arith.constant 0 : i32
    %c0_i32_0 = arith.constant 0 : i32
    return %arg0, %c0_i32 : i32, i32
  }
}

</mosaic_0001>

<llo_original>
// kernel: tpu_custom_call.1
$region0: #{tpu_custom_call.1}
  #allocation0 [shape = 'u32[]', space=smem, size = 0x4, offset = 0x4, fixed_abs, tag = 'smem constant byte address 0x4 - core index']
  #allocation1 [shape = 'u32[144,128]{1,0:T(1,128)}', space=vmem, size = 0x12000, scoped, tag = 'internal scratch']
  %s0 = inlined_call_operand.hbm [shape: f32[16,128], index: 0, kind: input, shape index: {}]
  %s1 = inlined_call_operand.hbm [shape: f32[128,128], index: 1, kind: input, shape index: {}]
  %s2 = inlined_call_operand.vmem [shape: f32[1,128], index: 2, kind: input, shape index: {}]
  %s3 = inlined_call_operand.hbm [shape: f32[128,128], index: 3, kind: input, shape index: {}]
  %s4 = inlined_call_operand.vmem [shape: f32[1,128], index: 4, kind: input, shape index: {}]
  %s5 = inlined_call_operand.hbm [shape: f32[16,128], index: 5, kind: output, shape index: {}]
  %s6 = sld [smem:[#allocation0]]
  $region42: #{tpu_custom_call.1} parent=0
    _
  %s8 = ssub.s32 1, %s6
  %s9 = scalar_select 0, %s8, %s6
  $region1: #{tpu_custom_call.1} parent=0
    #allocation2 [shape = 'u8[8192]{0}', space=vmem, size = 0x2000, scoped, tag = 'input window, operand 0, single buffered']
    #allocation3 [shape = 's32[1]{0}', space=sflag, size = 0x4, scoped, tag = 'scoped memory for tpu_custom_call.1']
    #allocation4 [shape = 's32[1]{0}', space=sflag, size = 0x4, scoped, tag = 'scoped memory for tpu_custom_call.1']
    #allocation5 [shape = 'u8[65536]{0}', space=vmem, size = 0x10000, scoped, tag = 'input window, operand 1, single buffered']
    #allocation6 [shape = 's32[1]{0}', space=sflag, size = 0x4, scoped, tag = 'scoped memory for tpu_custom_call.1']
    #allocation7 [shape = 'u8[65536]{0}', space=vmem, size = 0x10000, scoped, tag = 'input window, operand 3, single buffered']
    #allocation8 [shape = 'u8[8192]{0}', space=vmem, size = 0x2000, scoped, tag = 'output window, operand 0, single buffered']
    %10 = vsyncpa [#allocation3], 0
    %11 = vsyncpa [#allocation6], 0
    %12 = vsyncpa [#allocation4], 0
    // Predicated region
    $region2: #{tpu_custom_call.1} parent=1 // pred_check
      _
    $region3: #{tpu_custom_call.1} parent=1 // pred_check_branch
      %14 = sbr.rel (0) target = $region5
    $region4: #{tpu_custom_call.1} parent=1 // pred_region
      %s16 = ssub.s32 256, 256
      %17 = vsyncadd [#allocation3], %s16
      %s18 = sshll.u32 [#allocation2], 4
      %s19 = int_to_ptr.vmem [resolvable:$true] %s18
      %24 = dma.hbm_to_vmem [thread:$0]  %s0, 256, %s19, [#allocation3], 128, 128, 8
    $region5: #{tpu_custom_call.1} parent=1 // pred_fallthru
      _
    // Predicated region
    $region6: #{tpu_custom_call.1} parent=1 // pred_check
      _
    $region7: #{tpu_custom_call.1} parent=1 // pred_check_branch
      %26 = sbr.rel (0) target = $region9
    $region8: #{tpu_custom_call.1} parent=1 // pred_region
      %s28 = ssub.s32 2048, 2048
      %29 = vsyncadd [#allocation6], %s28
      %s30 = sshll.u32 [#allocation5], 4
      %s31 = int_to_ptr.vmem [resolvable:$true] %s30
      %36 = dma.hbm_to_vmem [thread:$0]  %s1, 2048, %s31, [#allocation6], 128, 128, 8
    $region9: #{tpu_custom_call.1} parent=1 // pred_fallthru
      _
    // Predicated region
    $region10: #{tpu_custom_call.1} parent=1 // pred_check
      _
    $region11: #{tpu_custom_call.1} parent=1 // pred_check_branch
      %38 = sbr.rel (0) target = $region13
    $region12: #{tpu_custom_call.1} parent=1 // pred_region
      _
    $region13: #{tpu_custom_call.1} parent=1 // pred_fallthru
      _
    // Predicated region
    $region14: #{tpu_custom_call.1} parent=1 // pred_check
      _
    $region15: #{tpu_custom_call.1} parent=1 // pred_check_branch
      %40 = sbr.rel (0) target = $region17
    $region16: #{tpu_custom_call.1} parent=1 // pred_region
      %s42 = ssub.s32 2048, 2048
      %43 = vsyncadd [#allocation6], %s42
      %s44 = sshll.u32 [#allocation7], 4
      %s45 = int_to_ptr.vmem [resolvable:$true] %s44
      %50 = dma.hbm_to_vmem [thread:$0]  %s3, 2048, %s45, [#allocation6], 128, 128, 8
    $region17: #{tpu_custom_call.1} parent=1 // pred_fallthru
      _
    // Predicated region
    $region18: #{tpu_custom_call.1} parent=1 // pred_check
      _
    $region19: #{tpu_custom_call.1} parent=1 // pred_check_branch
      %52 = sbr.rel (0) target = $region21
    $region20: #{tpu_custom_call.1} parent=1 // pred_region
      _
    $region21: #{tpu_custom_call.1} parent=1 // pred_fallthru
      _
    // Predicated region
    $region22: #{tpu_custom_call.1} parent=1 // pred_check
      _
    $region23: #{tpu_custom_call.1} parent=1 // pred_check_branch
      %54 = sbr.rel (0) target = $region25
    $region24: #{tpu_custom_call.1} parent=1 // pred_region
      %55 = dma.done [#allocation3], 256
    $region25: #{tpu_custom_call.1} parent=1 // pred_fallthru
      _
    // Predicated region
    $region26: #{tpu_custom_call.1} parent=1 // pred_check
      _
    $region27: #{tpu_custom_call.1} parent=1 // pred_check_branch
      %57 = sbr.rel (0) target = $region29
    $region28: #{tpu_custom_call.1} parent=1 // pred_region
      %58 = dma.done [#allocation6], 2048
    $region29: #{tpu_custom_call.1} parent=1 // pred_fallthru
      _
    // Predicated region
    $region30: #{tpu_custom_call.1} parent=1 // pred_check
      _
    $region31: #{tpu_custom_call.1} parent=1 // pred_check_branch
      %60 = sbr.rel (0) target = $region33
    $region32: #{tpu_custom_call.1} parent=1 // pred_region
      %61 = dma.done [#allocation6], 2048
    $region33: #{tpu_custom_call.1} parent=1 // pred_fallthru
      _
    %v62 = vld [vmem:[#allocation2] sm:$0xff]
    %v63 = vld [vmem:[#allocation2 + $0x8] sm:$0xff]
    %v64 = vld [vmem:[#allocation5] sm:$0xff]
    %v65 = vld [vmem:[#allocation5 + $0x8] sm:$0xff]
    %v66 = vld [vmem:[#allocation5 + $0x10] sm:$0xff]
    %v67 = vld [vmem:[#allocation5 + $0x18] sm:$0xff]
    %v68 = vld [vmem:[#allocation5 + $0x20] sm:$0xff]
    %v69 = vld [vmem:[#allocation5 + $0x28] sm:$0xff]
    %v70 = vld [vmem:[#allocation5 + $0x30] sm:$0xff]
    %v71 = vld [vmem:[#allocation5 + $0x38] sm:$0xff]
    %v72 = vld [vmem:[#allocation5 + $0x40] sm:$0xff]
    %v73 = vld [vmem:[#allocation5 + $0x48] sm:$0xff]
    %v74 = vld [vmem:[#allocation5 + $0x50] sm:$0xff]
    %v75 = vld [vmem:[#allocation5 + $0x58] sm:$0xff]
    %v76 = vld [vmem:[#allocation5 + $0x60] sm:$0xff]
    %v77 = vld [vmem:[#allocation5 + $0x68] sm:$0xff]
    %v78 = vld [vmem:[#allocation5 + $0x70] sm:$0xff]
    %v79 = vld [vmem:[#allocation5 + $0x78] sm:$0xff]
    %v80 = vld [vmem:[%s2] sm:$0x1]
    %v82 = vlaneseq
    %v83 = vshrl.u32 %v82, 7
    %v84 = vsub.s32 0, %v83
    %v85 = vrot.slane %v80, %v84
    %87 = vmatprep.subr.mxu0 0.0
    %88 = vmatpush1.msra.mxu0 %v64
    %89 = vmatprep.subr.mxu0 0.0
    %90 = vmatpush1.msra.mxu0 %v65
    %91 = vmatprep.subr.mxu0 0.0
    %92 = vmatpush1.msra.mxu0 %v66
    %93 = vmatprep.subr.mxu0 0.0
    %94 = vmatpush1.msra.mxu0 %v67
    %95 = vmatprep.subr.mxu0 0.0
    %96 = vmatpush1.msra.mxu0 %v68
    %97 = vmatprep.subr.mxu0 0.0
    %98 = vmatpush1.msra.mxu0 %v69
    %99 = vmatprep.subr.mxu0 0.0
    %100 = vmatpush1.msra.mxu0 %v70
    %101 = vmatprep.subr.mxu0 0.0
    %102 = vmatpush1.msra.mxu0 %v71
    %103 = vmatprep.subr.mxu0 0.0
    %104 = vmatpush1.msra.mxu0 %v72
    %105 = vmatprep.subr.mxu0 0.0
    %106 = vmatpush1.msra.mxu0 %v73
    %107 = vmatprep.subr.mxu0 0.0
    %108 = vmatpush1.msra.mxu0 %v74
    %109 = vmatprep.subr.mxu0 0.0
    %110 = vmatpush1.msra.mxu0 %v75
    %111 = vmatprep.subr.mxu0 0.0
    %112 = vmatpush1.msra.mxu0 %v76
    %113 = vmatprep.subr.mxu0 0.0
    %114 = vmatpush1.msra.mxu0 %v77
    %115 = vmatprep.subr.mxu0 0.0
    %116 = vmatpush1.msra.mxu0 %v78
    %117 = vmatprep.subr.mxu0 0.0
    %118 = vmatpush1.msra.mxu0 %v79
    %119 = vmatprep.subr.mxu0 0.0
    %120 = vmatpush1.msra.mxu0 0.0
    %121 = vmatprep.subr.mxu0 0.0
    %122 = vmatpush1.msra.mxu0 0.0
    %123 = vmatprep.subr.mxu0 0.0
    %124 = vmatpush1.msra.mxu0 0.0
    %125 = vmatprep.subr.mxu0 0.0
    %126 = vmatpush1.msra.mxu0 0.0
    %127 = vmatprep.subr.mxu0 0.0
    %128 = vmatpush1.msra.mxu0 0.0
    %129 = vmatprep.subr.mxu0 0.0
    %130 = vmatpush1.msra.mxu0 0.0
    %131 = vmatprep.subr.mxu0 0.0
    %132 = vmatpush1.msra.mxu0 0.0
    %133 = vmatprep.subr.mxu0 0.0
    %134 = vmatpush1.msra.mxu0 0.0
    %135 = vmatprep.subr.mxu0 0.0
    %136 = vmatpush1.msra.mxu0 0.0
    %137 = vmatprep.subr.mxu0 0.0
    %138 = vmatpush1.msra.mxu0 0.0
    %139 = vmatprep.subr.mxu0 0.0
    %140 = vmatpush1.msra.mxu0 0.0
    %141 = vmatprep.subr.mxu0 0.0
    %142 = vmatpush1.msra.mxu0 0.0
    %143 = vmatprep.subr.mxu0 0.0
    %144 = vmatpush1.msra.mxu0 0.0
    %145 = vmatprep.subr.mxu0 0.0
    %146 = vmatpush1.msra.mxu0 0.0
    %147 = vmatprep.subr.mxu0 0.0
    %148 = vmatpush1.msra.mxu0 0.0
    %149 = vmatprep.subr.mxu0 0.0
    %150 = vmatpush1.msra.mxu0 0.0
    %151 = vmatprep.mubr.f32.mxu0 0.0
    %152 = vmatmul.mubr.f32.gmra.mrb[0].mxu0 %v62
    %v153 = vpop.f32.mrb[0].mxu0
    %v154 = vadd.f32 %v85, %v153
    %v155 = vpop.f32.mrb[0].mxu0
    %156 = vmatprep.mubr.f32.mxu0 0.0
    %157 = vmatmul.mubr.f32.gmra.mrb[0].mxu0 %v63
    %v158 = vpop.f32.mrb[0].mxu0
    %v159 = vadd.f32 %v85, %v158
    %v160 = vpop.f32.mrb[0].mxu0
    %161 = vdwg.mxu0
    %v162 = vld [vmem:[#allocation7] sm:$0xff]
    %v163 = vld [vmem:[#allocation7 + $0x8] sm:$0xff]
    %v164 = vld [vmem:[#allocation7 + $0x10] sm:$0xff]
    %v165 = vld [vmem:[#allocation7 + $0x18] sm:$0xff]
    %v166 = vld [vmem:[#allocation7 + $0x20] sm:$0xff]
    %v167 = vld [vmem:[#allocation7 + $0x28] sm:$0xff]
    %v168 = vld [vmem:[#allocation7 + $0x30] sm:$0xff]
    %v169 = vld [vmem:[#allocation7 + $0x38] sm:$0xff]
    %v170 = vld [vmem:[#allocation7 + $0x40] sm:$0xff]
    %v171 = vld [vmem:[#allocation7 + $0x48] sm:$0xff]
    %v172 = vld [vmem:[#allocation7 + $0x50] sm:$0xff]
    %v173 = vld [vmem:[#allocation7 + $0x58] sm:$0xff]
    %v174 = vld [vmem:[#allocation7 + $0x60] sm:$0xff]
    %v175 = vld [vmem:[#allocation7 + $0x68] sm:$0xff]
    %v176 = vld [vmem:[#allocation7 + $0x70] sm:$0xff]
    %v177 = vld [vmem:[#allocation7 + $0x78] sm:$0xff]
    %v178 = vld [vmem:[%s4] sm:$0x1]
    %v180 = vlaneseq
    %v181 = vshrl.u32 %v180, 7
    %v182 = vsub.s32 0, %v181
    %v183 = vrot.slane %v178, %v182
    %185 = vmatprep.subr.mxu0 0.0
    %186 = vmatpush1.msra.mxu0 %v162
    %187 = vmatprep.subr.mxu0 0.0
    %188 = vmatpush1.msra.mxu0 %v163
    %189 = vmatprep.subr.mxu0 0.0
    %190 = vmatpush1.msra.mxu0 %v164
    %191 = vmatprep.subr.mxu0 0.0
    %192 = vmatpush1.msra.mxu0 %v165
    %193 = vmatprep.subr.mxu0 0.0
    %194 = vmatpush1.msra.mxu0 %v166
    %195 = vmatprep.subr.mxu0 0.0
    %196 = vmatpush1.msra.mxu0 %v167
    %197 = vmatprep.subr.mxu0 0.0
    %198 = vmatpush1.msra.mxu0 %v168
    %199 = vmatprep.subr.mxu0 0.0
    %200 = vmatpush1.msra.mxu0 %v169
    %201 = vmatprep.subr.mxu0 0.0
    %202 = vmatpush1.msra.mxu0 %v170
    %203 = vmatprep.subr.mxu0 0.0
    %204 = vmatpush1.msra.mxu0 %v171
    %205 = vmatprep.subr.mxu0 0.0
    %206 = vmatpush1.msra.mxu0 %v172
    %207 = vmatprep.subr.mxu0 0.0
    %208 = vmatpush1.msra.mxu0 %v173
    %209 = vmatprep.subr.mxu0 0.0
    %210 = vmatpush1.msra.mxu0 %v174
    %211 = vmatprep.subr.mxu0 0.0
    %212 = vmatpush1.msra.mxu0 %v175
    %213 = vmatprep.subr.mxu0 0.0
    %214 = vmatpush1.msra.mxu0 %v176
    %215 = vmatprep.subr.mxu0 0.0
    %216 = vmatpush1.msra.mxu0 %v177
    %217 = vmatprep.subr.mxu0 0.0
    %218 = vmatpush1.msra.mxu0 0.0
    %219 = vmatprep.subr.mxu0 0.0
    %220 = vmatpush1.msra.mxu0 0.0
    %221 = vmatprep.subr.mxu0 0.0
    %222 = vmatpush1.msra.mxu0 0.0
    %223 = vmatprep.subr.mxu0 0.0
    %224 = vmatpush1.msra.mxu0 0.0
    %225 = vmatprep.subr.mxu0 0.0
    %226 = vmatpush1.msra.mxu0 0.0
    %227 = vmatprep.subr.mxu0 0.0
    %228 = vmatpush1.msra.mxu0 0.0
    %229 = vmatprep.subr.mxu0 0.0
    %230 = vmatpush1.msra.mxu0 0.0
    %231 = vmatprep.subr.mxu0 0.0
    %232 = vmatpush1.msra.mxu0 0.0
    %233 = vmatprep.subr.mxu0 0.0
    %234 = vmatpush1.msra.mxu0 0.0
    %235 = vmatprep.subr.mxu0 0.0
    %236 = vmatpush1.msra.mxu0 0.0
    %237 = vmatprep.subr.mxu0 0.0
    %238 = vmatpush1.msra.mxu0 0.0
    %239 = vmatprep.subr.mxu0 0.0
    %240 = vmatpush1.msra.mxu0 0.0
    %241 = vmatprep.subr.mxu0 0.0
    %242 = vmatpush1.msra.mxu0 0.0
    %243 = vmatprep.subr.mxu0 0.0
    %244 = vmatpush1.msra.mxu0 0.0
    %245 = vmatprep.subr.mxu0 0.0
    %246 = vmatpush1.msra.mxu0 0.0
    %247 = vmatprep.subr.mxu0 0.0
    %248 = vmatpush1.msra.mxu0 0.0
    %249 = vmatprep.mubr.f32.mxu0 0.0
    %250 = vmatmul.mubr.f32.gmra.mrb[0].mxu0 %v154
    %v251 = vpop.f32.mrb[0].mxu0
    %v252 = vadd.f32 %v183, %v251
    %v253 = vpop.f32.mrb[0].mxu0
    %254 = vmatprep.mubr.f32.mxu0 0.0
    %255 = vmatmul.mubr.f32.gmra.mrb[0].mxu0 %v159
    %v256 = vpop.f32.mrb[0].mxu0
    %v257 = vadd.f32 %v183, %v256
    %v258 = vpop.f32.mrb[0].mxu0
    %259 = vdwg.mxu0
    %260 = vst [vmem:[#allocation8] sm:$0xff] %v252
    %261 = vst [vmem:[#allocation8 + $0x8] sm:$0xff] %v257
    // Predicated region
    $region34: #{tpu_custom_call.1} parent=1 // pred_check
      _
    $region35: #{tpu_custom_call.1} parent=1 // pred_check_branch
      %263 = sbr.rel (0) target = $region37
    $region36: #{tpu_custom_call.1} parent=1 // pred_region
      %s265 = ssub.s32 256, 256
      %266 = vsyncadd [#allocation4], %s265
      %s267 = sshll.u32 [#allocation8], 4
      %s268 = int_to_ptr.vmem [resolvable:$true] %s267
      %273 = dma.vmem_to_hbm [thread:$0]  %s268, 256, %s5, [#allocation4], 128, 128, 8
    $region37: #{tpu_custom_call.1} parent=1 // pred_fallthru
      _
    // Predicated region
    $region38: #{tpu_custom_call.1} parent=1 // pred_check
      _
    $region39: #{tpu_custom_call.1} parent=1 // pred_check_branch
      %275 = sbr.rel (0) target = $region41
    $region40: #{tpu_custom_call.1} parent=1 // pred_region
      %276 = dma.done [#allocation4], 256
    $region41: #{tpu_custom_call.1} parent=1 // pred_fallthru
      _
    %277 = vsyncpa [#allocation3], 1
    %278 = vsyncpa [#allocation6], 1
    %279 = vsyncpa [#allocation4], 1

</llo_original>
